<compile_context>
chip_gen: v6e
topology: v6e:2x2x1
jax: 0.10.0
libtpu: 0.0.40
codegen_flags: <defaults>
</compile_context>

<pallas_src>
import functools

import jax
import jax.numpy as jnp
from jax import lax
from jax.experimental import pallas as pl
from jax.experimental.pallas import tpu as pltpu


def _round_up(x, m):
    return ((x + m - 1) // m) * m


# ----------------------------------------------------------------------------
# Pallas kernel: tiled matmul + fused activation
# ----------------------------------------------------------------------------
def _matmul_act_kernel(x_ref, w_ref, o_ref, acc_ref, *, act, slope):
    @pl.when(pl.program_id(2) == 0)
    def _init():
        acc_ref[...] = jnp.zeros_like(acc_ref)

    acc_ref[...] += jnp.dot(x_ref[...], w_ref[...],
                            preferred_element_type=jnp.float32)

    @pl.when(pl.program_id(2) == pl.num_programs(2) - 1)
    def _finalize():
        acc = acc_ref[...]                      # f32 (VPU-friendly on v5e too)
        if act == "leaky_relu":
            acc = jnp.where(acc >= 0.0, acc, slope * acc)
        o_ref[...] = acc.astype(o_ref.dtype)


def matmul_act(x, w, act, slope=0.2, out_dtype=jnp.float32):
    """(M,K) @ (K,Nc) with fused activation.  Pads M/K/Nc for TPU tiling."""
    M, K = x.shape
    K2, Nc = w.shape
    assert K == K2

    # --- tile sizes / padded shapes ---------------------------------------
    Np = _round_up(Nc, 128)                     # lane-dense output columns
    tn = 256 if (Np % 256 == 0) else 128
    Kp = _round_up(K, 128)
    if Kp <= 512:
        tk = Kp
    else:
        tk, Kp = 512, _round_up(K, 512)
    tm = min(256, _round_up(M, 8))
    Mp = _round_up(M, tm)

    # --- pad + cast to bf16 (MXU-native on v5e/v6e/v7x) ---------------------
    xb = x.astype(jnp.bfloat16)
    if (Mp, Kp) != (M, K):
        xb = jnp.zeros((Mp, Kp), jnp.bfloat16).at[:M, :K].set(xb)
    wb = w.astype(jnp.bfloat16)
    if (Kp, Np) != (K, Nc):
        wb = jnp.zeros((Kp, Np), jnp.bfloat16).at[:K, :Nc].set(wb)

    grid = (Mp // tm, Np // tn, Kp // tk)
    out_bytes = Mp * Np * jnp.dtype(out_dtype).itemsize

    out = pl.pallas_call(
        functools.partial(_matmul_act_kernel, act=act, slope=slope),
        out_shape=jax.ShapeDtypeStruct((Mp, Np), out_dtype),
        grid_spec=pltpu.PrefetchScalarGridSpec(
            num_scalar_prefetch=0,
            grid=grid,
            in_specs=[
                pl.BlockSpec((tm, tk), lambda i, j, k: (i, k)),
                pl.BlockSpec((tk, tn), lambda i, j, k: (k, j)),
            ],
            out_specs=pl.BlockSpec((tm, tn), lambda i, j, k: (i, j)),
            scratch_shapes=[pltpu.VMEM((tm, tn), jnp.float32)],
        ),
        compiler_params=pltpu.CompilerParams(
            dimension_semantics=("parallel", "parallel", "arbitrary")),
        cost_estimate=pl.CostEstimate(
            flops=2 * Mp * Np * Kp,
            transcendentals=0,
            bytes_accessed=xb.size * 2 + wb.size * 2 + out_bytes),
    )(xb, wb)

    return out[:M, :Nc]


# ----------------------------------------------------------------------------
# Glue: NHWC im2col conv (data movement only; matmul + act run in Pallas)
# ----------------------------------------------------------------------------
def conv2d_nhwc(x, w, stride, pad, act, out_dtype):
    """PyTorch Conv2d (bias=False).  x: (N,H,W,Cin) NHWC, w: (Cout,Cin,kH,kW)."""
    N, H, W, Cin = x.shape
    Cout, _, kH, kW = w.shape
    OH = (H + 2 * pad - kH) // stride + 1
    OW = (W + 2 * pad - kW) // stride + 1
    xp = jnp.pad(x, ((0, 0), (pad, pad), (pad, pad), (0, 0)))
    # strided patches; K ordering = (kh, kw, Cin)
    cols = jnp.concatenate(
        [xp[:, kh:kh + (OH - 1) * stride + 1:stride,
            kw:kw + (OW - 1) * stride + 1:stride, :]
         for kh in range(kH) for kw in range(kW)],
        axis=-1)                                        # (N, OH, OW, kH*kW*Cin)
    cols = cols.reshape(N * OH * OW, kH * kW * Cin)
    wm = jnp.transpose(w, (2, 3, 1, 0)).reshape(kH * kW * Cin, Cout)
    out = matmul_act(cols, wm, act, out_dtype=out_dtype)  # (N*OH*OW, Cout)
    return out.reshape(N, OH, OW, Cout)


# ----------------------------------------------------------------------------
# Model: DCGAN_D_nobn
# ----------------------------------------------------------------------------
def build_params(key, isize, nz, nc, ndf, n_extra_layers=0):
    assert isize % 16 == 0, "isize has to be a multiple of 16"
    del nz  # discriminator does not use nz
    keys = jax.random.split(key, 32)
    ki = 0

    def nrm(shape):
        nonlocal ki
        w = (0.05 * jax.random.normal(keys[ki], shape)).astype(jnp.float32)
        ki += 1
        return w

    layers = []  # (weight OIHW, stride, pad, act)
    # initial: Conv2d(nc, ndf, 4, 2, 1) + LeakyReLU(0.2)
    layers.append((nrm((ndf, nc, 4, 4)), 2, 1, "leaky_relu"))
    csize, cndf = isize // 2, ndf
    # extra layers: Conv2d(cndf, cndf, 3, 1, 1) + LeakyReLU(0.2)
    for _ in range(n_extra_layers):
        layers.append((nrm((cndf, cndf, 3, 3)), 1, 1, "leaky_relu"))
    # pyramid: Conv2d(cndf, 2*cndf, 4, 2, 1) + LeakyReLU(0.2)
    while csize > 4:
        layers.append((nrm((cndf * 2, cndf, 4, 4)), 2, 1, "leaky_relu"))
        cndf *= 2
        csize //= 2
    # final: Conv2d(cndf, 1, 4, 1, 0), no activation
    layers.append((nrm((1, cndf, 4, 4)), 1, 0, "none"))
    return layers


def dcgan_d_nobn_forward(x_nchw, layers):
    # single NCHW -> NHWC transpose; activations stay NHWC (bf16) across layers
    out = jnp.transpose(x_nchw, (0, 2, 3, 1))
    n_layers = len(layers)
    for li, (w, stride, pad, act) in enumerate(layers):
        is_last = li == n_layers - 1
        out = conv2d_nhwc(out, w, stride, pad, act,
                          out_dtype=jnp.float32 if is_last else jnp.bfloat16)
    # out: (N, 1, 1, 1)  ->  output.mean(0).view(1)
    return jnp.mean(out, axis=0).reshape(1)


# ----------------------------------------------------------------------------
# Pure-JAX reference (f32) for correctness checking
# ----------------------------------------------------------------------------
def _ref_forward(x_nchw, layers):
    out = x_nchw
    for w, stride, pad, act in layers:
        out = lax.conv_general_dilated(
            out, w, window_strides=(stride, stride),
            padding=[(pad, pad), (pad, pad)],
            dimension_numbers=("NCHW", "OIHW", "NCHW"))
        if act == "leaky_relu":
            out = jnp.where(out >= 0.0, out, 0.2 * out)
    return jnp.mean(out, axis=0).reshape(1)


# ----------------------------------------------------------------------------
if __name__ == "__main__":
    # Small config: isize=16, nc=4, ndf=8, batch=2, one extra layer
    isize, nz, nc, ndf = 16, 8, 4, 8
    batch, n_extra = 2, 1

    key = jax.random.PRNGKey(0)
    kx, kp = jax.random.split(key)
    x = jax.random.normal(kx, (batch, nc, isize, isize), dtype=jnp.float32)

    layers = build_params(kp, isize, nz, nc, ndf, n_extra_layers=n_extra)

    fwd = jax.jit(lambda inp: dcgan_d_nobn_forward(inp, layers))
    out = jax.block_until_ready(fwd(x))

    assert out.shape == (1,), out.shape
    assert bool(jnp.all(jnp.isfinite(out))), "non-finite output"

    ref = _ref_forward(x, layers)
    assert bool(jnp.allclose(out, ref, rtol=5e-2, atol=2e-2)), (out, ref)

    print("KERNEL_OK")
</pallas_src>

<mosaic_0001>
module attributes {stable_mosaic.version = 11 : i64} {
  func.func @_matmul_act_kernel(%arg0: i32, %arg1: i32, %arg2: i32, %arg3: memref<128x128xbf16, #tpu.memory_space<vmem>>, %arg4: memref<128x128xbf16, #tpu.memory_space<vmem>>, %arg5: memref<128x128xbf16, #tpu.memory_space<vmem>>, %arg6: memref<128x128xf32, #tpu.memory_space<vmem>>) attributes {dimension_semantics = [#tpu.dimension_semantics<parallel>, #tpu.dimension_semantics<parallel>, #tpu.dimension_semantics<arbitrary>], iteration_bounds = array<i64: 1, 1, 1>, scalar_prefetch = 0 : i64, scratch_operands = 1 : i64, tpu.core_type = #tpu.core_type<tc>, window_params = [{transform_indices = @transform_0, window_bounds = array<i64: 128, 128>}, {transform_indices = @transform_1, window_bounds = array<i64: 128, 128>}, {transform_indices = @transform_2, window_bounds = array<i64: 128, 128>}]} {
    %c0_i32 = arith.constant 0 : i32
    %0 = arith.cmpi eq, %arg2, %c0_i32 : i32
    %1 = arith.extui %0 : i1 to i32
    %c0_i32_0 = arith.constant 0 : i32
    %2 = arith.cmpi ne, %1, %c0_i32_0 : i32
    scf.if %2 {
      %cst_10 = arith.constant 0.000000e+00 : f32
      %12 = vector.broadcast %cst_10 : f32 to vector<128x128xf32>
      %c0_11 = arith.constant 0 : index
      %c0_12 = arith.constant 0 : index
      %13 = vector.load %arg6[%c0_11, %c0_12] : memref<128x128xf32, #tpu.memory_space<vmem>>, vector<128x128xf32>
      tpu.vector_store %arg6[%c0_11, %c0_12], %12 {strides = array<i32>} : memref<128x128xf32, #tpu.memory_space<vmem>>, vector<128x128xf32>,
    } else {
    }
    %c0 = arith.constant 0 : index
    %c0_1 = arith.constant 0 : index
    %3 = vector.load %arg6[%c0, %c0_1] : memref<128x128xf32, #tpu.memory_space<vmem>>, vector<128x128xf32>
    %c0_2 = arith.constant 0 : index
    %c0_3 = arith.constant 0 : index
    %4 = vector.load %arg3[%c0_2, %c0_3] : memref<128x128xbf16, #tpu.memory_space<vmem>>, vector<128x128xbf16>
    %c0_4 = arith.constant 0 : index
    %c0_5 = arith.constant 0 : index
    %5 = vector.load %arg4[%c0_4, %c0_5] : memref<128x128xbf16, #tpu.memory_space<vmem>>, vector<128x128xbf16>
    %cst = arith.constant dense<0.000000e+00> : vector<128x128xf32>
    %6 = tpu.matmul %4, %5, %cst {dimension_numbers = #tpu.dot_dimension_numbers<[1], [0], [0], [1], [0, 0, 1, 1], [], []>} : vector<128x128xbf16>, vector<128x128xbf16>, vector<128x128xf32> -> vector<128x128xf32>
    %7 = arith.addf %3, %6 : vector<128x128xf32>
    %c0_6 = arith.constant 0 : index
    %c0_7 = arith.constant 0 : index
    %8 = vector.load %arg6[%c0_6, %c0_7] : memref<128x128xf32, #tpu.memory_space<vmem>>, vector<128x128xf32>
    tpu.vector_store %arg6[%c0_6, %c0_7], %7 {strides = array<i32>} : memref<128x128xf32, #tpu.memory_space<vmem>>, vector<128x128xf32>,
    %c0_i32_8 = arith.constant 0 : i32
    %9 = arith.cmpi eq, %arg2, %c0_i32_8 : i32
    %10 = arith.extui %9 : i1 to i32
    %c0_i32_9 = arith.constant 0 : i32
    %11 = arith.cmpi ne, %10, %c0_i32_9 : i32
    scf.if %11 {
      %c0_10 = arith.constant 0 : index
      %c0_11 = arith.constant 0 : index
      %12 = vector.load %arg6[%c0_10, %c0_11] : memref<128x128xf32, #tpu.memory_space<vmem>>, vector<128x128xf32>
      %cst_12 = arith.constant 0.000000e+00 : f32
      %13 = vector.broadcast %cst_12 : f32 to vector<128x128xf32>
      %14 = arith.cmpf oge, %12, %13 : vector<128x128xf32>
      %cst_13 = arith.constant 2.000000e-01 : f32
      %15 = vector.broadcast %cst_13 : f32 to vector<128x128xf32>
      %16 = arith.mulf %15, %12 : vector<128x128xf32>
      %17 = arith.select %14, %12, %16 : vector<128x128xi1>, vector<128x128xf32>
      %18 = arith.truncf %17 : vector<128x128xf32> to vector<128x128xbf16>
      %c0_14 = arith.constant 0 : index
      %c0_15 = arith.constant 0 : index
      %19 = vector.load %arg5[%c0_14, %c0_15] : memref<128x128xbf16, #tpu.memory_space<vmem>>, vector<128x128xbf16>
      tpu.vector_store %arg5[%c0_14, %c0_15], %18 {strides = array<i32>} : memref<128x128xbf16, #tpu.memory_space<vmem>>, vector<128x128xbf16>,
    } else {
    }
    return
  }
  func.func @transform_0(%arg0: i32, %arg1: i32, %arg2: i32) -> (i32, i32) {
    %c0_i32 = arith.constant 0 : i32
    return %arg0, %arg2 : i32, i32
  }
  func.func @transform_1(%arg0: i32, %arg1: i32, %arg2: i32) -> (i32, i32) {
    %c0_i32 = arith.constant 0 : i32
    return %arg2, %arg1 : i32, i32
  }
  func.func @transform_2(%arg0: i32, %arg1: i32, %arg2: i32) -> (i32, i32) {
    %c0_i32 = arith.constant 0 : i32
    return %arg0, %arg1 : i32, i32
  }
}

module attributes {stable_mosaic.version = 11 : i64} {
  func.func @_matmul_act_kernel(%arg0: i32, %arg1: i32, %arg2: i32, %arg3: memref<32x128xbf16, #tpu.memory_space<vmem>>, %arg4: memref<128x128xbf16, #tpu.memory_space<vmem>>, %arg5: memref<32x128xbf16, #tpu.memory_space<vmem>>, %arg6: memref<32x128xf32, #tpu.memory_space<vmem>>) attributes {dimension_semantics = [#tpu.dimension_semantics<parallel>, #tpu.dimension_semantics<parallel>, #tpu.dimension_semantics<arbitrary>], iteration_bounds = array<i64: 1, 1, 1>, scalar_prefetch = 0 : i64, scratch_operands = 1 : i64, tpu.core_type = #tpu.core_type<tc>, window_params = [{transform_indices = @transform_0, window_bounds = array<i64: 32, 128>}, {transform_indices = @transform_1, window_bounds = array<i64: 128, 128>}, {transform_indices = @transform_2, window_bounds = array<i64: 32, 128>}]} {
    %c0_i32 = arith.constant 0 : i32
    %0 = arith.cmpi eq, %arg2, %c0_i32 : i32
    %1 = arith.extui %0 : i1 to i32
    %c0_i32_0 = arith.constant 0 : i32
    %2 = arith.cmpi ne, %1, %c0_i32_0 : i32
    scf.if %2 {
      %cst_10 = arith.constant 0.000000e+00 : f32
      %12 = vector.broadcast %cst_10 : f32 to vector<32x128xf32>
      %c0_11 = arith.constant 0 : index
      %c0_12 = arith.constant 0 : index
      %13 = vector.load %arg6[%c0_11, %c0_12] : memref<32x128xf32, #tpu.memory_space<vmem>>, vector<32x128xf32>
      tpu.vector_store %arg6[%c0_11, %c0_12], %12 {strides = array<i32>} : memref<32x128xf32, #tpu.memory_space<vmem>>, vector<32x128xf32>,
    } else {
    }
    %c0 = arith.constant 0 : index
    %c0_1 = arith.constant 0 : index
    %3 = vector.load %arg6[%c0, %c0_1] : memref<32x128xf32, #tpu.memory_space<vmem>>, vector<32x128xf32>
    %c0_2 = arith.constant 0 : index
    %c0_3 = arith.constant 0 : index
    %4 = vector.load %arg3[%c0_2, %c0_3] : memref<32x128xbf16, #tpu.memory_space<vmem>>, vector<32x128xbf16>
    %c0_4 = arith.constant 0 : index
    %c0_5 = arith.constant 0 : index
    %5 = vector.load %arg4[%c0_4, %c0_5] : memref<128x128xbf16, #tpu.memory_space<vmem>>, vector<128x128xbf16>
    %cst = arith.constant dense<0.000000e+00> : vector<32x128xf32>
    %6 = tpu.matmul %4, %5, %cst {dimension_numbers = #tpu.dot_dimension_numbers<[1], [0], [0], [1], [0, 0, 1, 1], [], []>} : vector<32x128xbf16>, vector<128x128xbf16>, vector<32x128xf32> -> vector<32x128xf32>
    %7 = arith.addf %3, %6 : vector<32x128xf32>
    %c0_6 = arith.constant 0 : index
    %c0_7 = arith.constant 0 : index
    %8 = vector.load %arg6[%c0_6, %c0_7] : memref<32x128xf32, #tpu.memory_space<vmem>>, vector<32x128xf32>
    tpu.vector_store %arg6[%c0_6, %c0_7], %7 {strides = array<i32>} : memref<32x128xf32, #tpu.memory_space<vmem>>, vector<32x128xf32>,
    %c0_i32_8 = arith.constant 0 : i32
    %9 = arith.cmpi eq, %arg2, %c0_i32_8 : i32
    %10 = arith.extui %9 : i1 to i32
    %c0_i32_9 = arith.constant 0 : i32
    %11 = arith.cmpi ne, %10, %c0_i32_9 : i32
    scf.if %11 {
      %c0_10 = arith.constant 0 : index
      %c0_11 = arith.constant 0 : index
      %12 = vector.load %arg6[%c0_10, %c0_11] : memref<32x128xf32, #tpu.memory_space<vmem>>, vector<32x128xf32>
      %cst_12 = arith.constant 0.000000e+00 : f32
      %13 = vector.broadcast %cst_12 : f32 to vector<32x128xf32>
      %14 = arith.cmpf oge, %12, %13 : vector<32x128xf32>
      %cst_13 = arith.constant 2.000000e-01 : f32
      %15 = vector.broadcast %cst_13 : f32 to vector<32x128xf32>
      %16 = arith.mulf %15, %12 : vector<32x128xf32>
      %17 = arith.select %14, %12, %16 : vector<32x128xi1>, vector<32x128xf32>
      %18 = arith.truncf %17 : vector<32x128xf32> to vector<32x128xbf16>
      %c0_14 = arith.constant 0 : index
      %c0_15 = arith.constant 0 : index
      %19 = vector.load %arg5[%c0_14, %c0_15] : memref<32x128xbf16, #tpu.memory_space<vmem>>, vector<32x128xbf16>
      tpu.vector_store %arg5[%c0_14, %c0_15], %18 {strides = array<i32>} : memref<32x128xbf16, #tpu.memory_space<vmem>>, vector<32x128xbf16>,
    } else {
    }
    return
  }
  func.func @transform_0(%arg0: i32, %arg1: i32, %arg2: i32) -> (i32, i32) {
    %c0_i32 = arith.constant 0 : i32
    return %arg0, %arg2 : i32, i32
  }
  func.func @transform_1(%arg0: i32, %arg1: i32, %arg2: i32) -> (i32, i32) {
    %c0_i32 = arith.constant 0 : i32
    return %arg2, %arg1 : i32, i32
  }
  func.func @transform_2(%arg0: i32, %arg1: i32, %arg2: i32) -> (i32, i32) {
    %c0_i32 = arith.constant 0 : i32
    return %arg0, %arg1 : i32, i32
  }
}

module attributes {stable_mosaic.version = 11 : i64} {
  func.func @_matmul_act_kernel(%arg0: i32, %arg1: i32, %arg2: i32, %arg3: memref<8x256xbf16, #tpu.memory_space<vmem>>, %arg4: memref<256x128xbf16, #tpu.memory_space<vmem>>, %arg5: memref<8x128xf32, #tpu.memory_space<vmem>>, %arg6: memref<8x128xf32, #tpu.memory_space<vmem>>) attributes {dimension_semantics = [#tpu.dimension_semantics<parallel>, #tpu.dimension_semantics<parallel>, #tpu.dimension_semantics<arbitrary>], iteration_bounds = array<i64: 1, 1, 1>, scalar_prefetch = 0 : i64, scratch_operands = 1 : i64, tpu.core_type = #tpu.core_type<tc>, window_params = [{transform_indices = @transform_0, window_bounds = array<i64: 8, 256>}, {transform_indices = @transform_1, window_bounds = array<i64: 256, 128>}, {transform_indices = @transform_2, window_bounds = array<i64: 8, 128>}]} {
    %c0_i32 = arith.constant 0 : i32
    %0 = arith.cmpi eq, %arg2, %c0_i32 : i32
    %1 = arith.extui %0 : i1 to i32
    %c0_i32_0 = arith.constant 0 : i32
    %2 = arith.cmpi ne, %1, %c0_i32_0 : i32
    scf.if %2 {
      %cst_10 = arith.constant 0.000000e+00 : f32
      %12 = vector.broadcast %cst_10 : f32 to vector<8x128xf32>
      %c0_11 = arith.constant 0 : index
      %c0_12 = arith.constant 0 : index
      %13 = vector.load %arg6[%c0_11, %c0_12] : memref<8x128xf32, #tpu.memory_space<vmem>>, vector<8x128xf32>
      tpu.vector_store %arg6[%c0_11, %c0_12], %12 {strides = array<i32>} : memref<8x128xf32, #tpu.memory_space<vmem>>, vector<8x128xf32>,
    } else {
    }
    %c0 = arith.constant 0 : index
    %c0_1 = arith.constant 0 : index
    %3 = vector.load %arg6[%c0, %c0_1] : memref<8x128xf32, #tpu.memory_space<vmem>>, vector<8x128xf32>
    %c0_2 = arith.constant 0 : index
    %c0_3 = arith.constant 0 : index
    %4 = vector.load %arg3[%c0_2, %c0_3] : memref<8x256xbf16, #tpu.memory_space<vmem>>, vector<8x256xbf16>
    %c0_4 = arith.constant 0 : index
    %c0_5 = arith.constant 0 : index
    %5 = vector.load %arg4[%c0_4, %c0_5] : memref<256x128xbf16, #tpu.memory_space<vmem>>, vector<256x128xbf16>
    %cst = arith.constant dense<0.000000e+00> : vector<8x128xf32>
    %6 = tpu.matmul %4, %5, %cst {dimension_numbers = #tpu.dot_dimension_numbers<[1], [0], [0], [1], [0, 0, 1, 1], [], []>} : vector<8x256xbf16>, vector<256x128xbf16>, vector<8x128xf32> -> vector<8x128xf32>
    %7 = arith.addf %3, %6 : vector<8x128xf32>
    %c0_6 = arith.constant 0 : index
    %c0_7 = arith.constant 0 : index
    %8 = vector.load %arg6[%c0_6, %c0_7] : memref<8x128xf32, #tpu.memory_space<vmem>>, vector<8x128xf32>
    tpu.vector_store %arg6[%c0_6, %c0_7], %7 {strides = array<i32>} : memref<8x128xf32, #tpu.memory_space<vmem>>, vector<8x128xf32>,
    %c0_i32_8 = arith.constant 0 : i32
    %9 = arith.cmpi eq, %arg2, %c0_i32_8 : i32
    %10 = arith.extui %9 : i1 to i32
    %c0_i32_9 = arith.constant 0 : i32
    %11 = arith.cmpi ne, %10, %c0_i32_9 : i32
    scf.if %11 {
      %c0_10 = arith.constant 0 : index
      %c0_11 = arith.constant 0 : index
      %12 = vector.load %arg6[%c0_10, %c0_11] : memref<8x128xf32, #tpu.memory_space<vmem>>, vector<8x128xf32>
      %c0_12 = arith.constant 0 : index
      %c0_13 = arith.constant 0 : index
      %13 = vector.load %arg5[%c0_12, %c0_13] : memref<8x128xf32, #tpu.memory_space<vmem>>, vector<8x128xf32>
      tpu.vector_store %arg5[%c0_12, %c0_13], %12 {strides = array<i32>} : memref<8x128xf32, #tpu.memory_space<vmem>>, vector<8x128xf32>,
    } else {
    }
    return
  }
  func.func @transform_0(%arg0: i32, %arg1: i32, %arg2: i32) -> (i32, i32) {
    %c0_i32 = arith.constant 0 : i32
    return %arg0, %arg2 : i32, i32
  }
  func.func @transform_1(%arg0: i32, %arg1: i32, %arg2: i32) -> (i32, i32) {
    %c0_i32 = arith.constant 0 : i32
    return %arg2, %arg1 : i32, i32
  }
  func.func @transform_2(%arg0: i32, %arg1: i32, %arg2: i32) -> (i32, i32) {
    %c0_i32 = arith.constant 0 : i32
    return %arg0, %arg1 : i32, i32
  }
}

</mosaic_0001>

<llo_original>
// kernel: _lambda_.4
$region0: #{_lambda_.4}
  #allocation0 [shape = 'u32[]', space=smem, size = 0x4, offset = 0x4, fixed_abs, tag = 'smem constant byte address 0x4 - core index']
  #allocation1 [shape = 'u32[144,128]{1,0:T(1,128)}', space=vmem, size = 0x12000, scoped, tag = 'internal scratch']
  #allocation2 [shape = 'f32[128,128]{1,0:T(8,128)}', space=vmem, size = 0x10000, scoped, tag = 'scratch operand']
  %s0 = inlined_call_operand.vmem [shape: bf16[128,128], index: 0, kind: input, shape index: {}]
  %s1 = inlined_call_operand.vmem [shape: bf16[128,128], index: 1, kind: input, shape index: {}]
  %s2 = inlined_call_operand.vmem [shape: bf16[128,128], index: 2, kind: output, shape index: {}]
  %s3 = sld [smem:[#allocation0]]
  $region26: #{_lambda_.4} parent=0
    _
  %s5 = ssub.s32 1, %s3
  %s6 = scalar_select 0, %s5, %s3
  // Predicated region
  $region2: #{_lambda_.4} parent=0 // pred_check
    _
  $region3: #{_lambda_.4} parent=0 // pred_check_branch
    %8 = sbr.rel (0) target = $region5
  $region4: #{_lambda_.4} parent=0 // pred_region
    _
  $region5: #{_lambda_.4} parent=0 // pred_fallthru
    _
  // Predicated region
  $region6: #{_lambda_.4} parent=0 // pred_check
    _
  $region7: #{_lambda_.4} parent=0 // pred_check_branch
    %10 = sbr.rel (0) target = $region9
  $region8: #{_lambda_.4} parent=0 // pred_region
    _
  $region9: #{_lambda_.4} parent=0 // pred_fallthru
    _
  %p12 = scmp.eq.s32.totalorder 0, 0
  // Predicated region
  $region10: #{_lambda_.4} parent=0 // pred_check
    %p13 = pneg %p12
  $region11: #{_lambda_.4} parent=0 // pred_check_branch
    %15 = sbr.rel (%p13) target = $region13
  $region12: #{_lambda_.4} parent=0 // pred_region
    %16 = vst [vmem:[#allocation2] sm:$0xff] 0.0
    %17 = vst [vmem:[#allocation2 + $0x8] sm:$0xff] 0.0
    %18 = vst [vmem:[#allocation2 + $0x10] sm:$0xff] 0.0
    %19 = vst [vmem:[#allocation2 + $0x18] sm:$0xff] 0.0
    %20 = vst [vmem:[#allocation2 + $0x20] sm:$0xff] 0.0
    %21 = vst [vmem:[#allocation2 + $0x28] sm:$0xff] 0.0
    %22 = vst [vmem:[#allocation2 + $0x30] sm:$0xff] 0.0
    %23 = vst [vmem:[#allocation2 + $0x38] sm:$0xff] 0.0
    %24 = vst [vmem:[#allocation2 + $0x40] sm:$0xff] 0.0
    %25 = vst [vmem:[#allocation2 + $0x48] sm:$0xff] 0.0
    %26 = vst [vmem:[#allocation2 + $0x50] sm:$0xff] 0.0
    %27 = vst [vmem:[#allocation2 + $0x58] sm:$0xff] 0.0
    %28 = vst [vmem:[#allocation2 + $0x60] sm:$0xff] 0.0
    %29 = vst [vmem:[#allocation2 + $0x68] sm:$0xff] 0.0
    %30 = vst [vmem:[#allocation2 + $0x70] sm:$0xff] 0.0
    %31 = vst [vmem:[#allocation2 + $0x78] sm:$0xff] 0.0
  $region13: #{_lambda_.4} parent=0 // pred_fallthru
    _
  %v32 = vld [vmem:[#allocation2] sm:$0xff]
  %v33 = vld [vmem:[#allocation2 + $0x8] sm:$0xff]
  %v34 = vld [vmem:[#allocation2 + $0x10] sm:$0xff]
  %v35 = vld [vmem:[#allocation2 + $0x18] sm:$0xff]
  %v36 = vld [vmem:[#allocation2 + $0x20] sm:$0xff]
  %v37 = vld [vmem:[#allocation2 + $0x28] sm:$0xff]
  %v38 = vld [vmem:[#allocation2 + $0x30] sm:$0xff]
  %v39 = vld [vmem:[#allocation2 + $0x38] sm:$0xff]
  %v40 = vld [vmem:[#allocation2 + $0x40] sm:$0xff]
  %v41 = vld [vmem:[#allocation2 + $0x48] sm:$0xff]
  %v42 = vld [vmem:[#allocation2 + $0x50] sm:$0xff]
  %v43 = vld [vmem:[#allocation2 + $0x58] sm:$0xff]
  %v44 = vld [vmem:[#allocation2 + $0x60] sm:$0xff]
  %v45 = vld [vmem:[#allocation2 + $0x68] sm:$0xff]
  %v46 = vld [vmem:[#allocation2 + $0x70] sm:$0xff]
  %v47 = vld [vmem:[#allocation2 + $0x78] sm:$0xff]
  %v48 = vld [vmem:[%s0] sm:$0xf]
  %v49 = vld [vmem:[%s0 + $0x4] sm:$0xf]
  %v50 = vld [vmem:[%s0 + $0x8] sm:$0xf]
  %v51 = vld [vmem:[%s0 + $0xc] sm:$0xf]
  %v52 = vld [vmem:[%s0 + $0x10] sm:$0xf]
  %v53 = vld [vmem:[%s0 + $0x14] sm:$0xf]
  %v54 = vld [vmem:[%s0 + $0x18] sm:$0xf]
  %v55 = vld [vmem:[%s0 + $0x1c] sm:$0xf]
  %v56 = vld [vmem:[%s0 + $0x20] sm:$0xf]
  %v57 = vld [vmem:[%s0 + $0x24] sm:$0xf]
  %v58 = vld [vmem:[%s0 + $0x28] sm:$0xf]
  %v59 = vld [vmem:[%s0 + $0x2c] sm:$0xf]
  %v60 = vld [vmem:[%s0 + $0x30] sm:$0xf]
  %v61 = vld [vmem:[%s0 + $0x34] sm:$0xf]
  %v62 = vld [vmem:[%s0 + $0x38] sm:$0xf]
  %v63 = vld [vmem:[%s0 + $0x3c] sm:$0xf]
  %v64 = vld [vmem:[%s1] sm:$0xf]
  %v65 = vld [vmem:[%s1 + $0x4] sm:$0xf]
  %v66 = vld [vmem:[%s1 + $0x8] sm:$0xf]
  %v67 = vld [vmem:[%s1 + $0xc] sm:$0xf]
  %v68 = vld [vmem:[%s1 + $0x10] sm:$0xf]
  %v69 = vld [vmem:[%s1 + $0x14] sm:$0xf]
  %v70 = vld [vmem:[%s1 + $0x18] sm:$0xf]
  %v71 = vld [vmem:[%s1 + $0x1c] sm:$0xf]
  %v72 = vld [vmem:[%s1 + $0x20] sm:$0xf]
  %v73 = vld [vmem:[%s1 + $0x24] sm:$0xf]
  %v74 = vld [vmem:[%s1 + $0x28] sm:$0xf]
  %v75 = vld [vmem:[%s1 + $0x2c] sm:$0xf]
  %v76 = vld [vmem:[%s1 + $0x30] sm:$0xf]
  %v77 = vld [vmem:[%s1 + $0x34] sm:$0xf]
  %v78 = vld [vmem:[%s1 + $0x38] sm:$0xf]
  %v79 = vld [vmem:[%s1 + $0x3c] sm:$0xf]
  %v96 = vunpack.c.l.b16 %v48
  %v97 = vunpack.c.l.b16 %v49
  %v98 = vunpack.c.l.b16 %v50
  %v99 = vunpack.c.l.b16 %v51
  %v100 = vunpack.c.l.b16 %v52
  %v101 = vunpack.c.l.b16 %v53
  %v102 = vunpack.c.l.b16 %v54
  %v103 = vunpack.c.l.b16 %v55
  %v104 = vunpack.c.l.b16 %v56
  %v105 = vunpack.c.l.b16 %v57
  %v106 = vunpack.c.l.b16 %v58
  %v107 = vunpack.c.l.b16 %v59
  %v108 = vunpack.c.l.b16 %v60
  %v109 = vunpack.c.l.b16 %v61
  %v110 = vunpack.c.l.b16 %v62
  %v111 = vunpack.c.l.b16 %v63
  %v112 = vpack.c.b16 %v97, %v96
  %v113 = vpack.c.b16 %v99, %v98
  %v114 = vpack.c.b16 %v101, %v100
  %v115 = vpack.c.b16 %v103, %v102
  %v116 = vpack.c.b16 %v105, %v104
  %v117 = vpack.c.b16 %v107, %v106
  %v118 = vpack.c.b16 %v109, %v108
  %v119 = vpack.c.b16 %v111, %v110
  %v144 = vunpack.c.l.b16 %v64
  %v145 = vunpack.c.l.b16 %v65
  %v146 = vunpack.c.l.b16 %v66
  %v147 = vunpack.c.l.b16 %v67
  %v148 = vunpack.c.l.b16 %v68
  %v149 = vunpack.c.l.b16 %v69
  %v150 = vunpack.c.l.b16 %v70
  %v151 = vunpack.c.l.b16 %v71
  %v152 = vunpack.c.l.b16 %v72
  %v153 = vunpack.c.l.b16 %v73
  %v154 = vunpack.c.l.b16 %v74
  %v155 = vunpack.c.l.b16 %v75
  %v156 = vunpack.c.l.b16 %v76
  %v157 = vunpack.c.l.b16 %v77
  %v158 = vunpack.c.l.b16 %v78
  %v159 = vunpack.c.l.b16 %v79
  %v160 = vpack.c.b16 %v145, %v144
  %v161 = vpack.c.b16 %v147, %v146
  %v162 = vpack.c.b16 %v149, %v148
  %v163 = vpack.c.b16 %v151, %v150
  %v164 = vpack.c.b16 %v153, %v152
  %v165 = vpack.c.b16 %v155, %v154
  %v166 = vpack.c.b16 %v157, %v156
  %v167 = vpack.c.b16 %v159, %v158
  %176 = vmatprep.subr.bf16.mxu0 0
  %177 = vmatpush1.bf16.msra.mxu0 %v167
  %178 = vmatprep.subr.bf16.mxu0 0
  %179 = vmatpush1.bf16.msra.mxu0 %v166
  %180 = vmatprep.subr.bf16.mxu0 0
  %181 = vmatpush1.bf16.msra.mxu0 %v165
  %182 = vmatprep.subr.bf16.mxu0 0
  %183 = vmatpush1.bf16.msra.mxu0 %v164
  %184 = vmatprep.subr.bf16.mxu0 0
  %185 = vmatpush1.bf16.msra.mxu0 %v163
  %186 = vmatprep.subr.bf16.mxu0 0
  %187 = vmatpush1.bf16.msra.mxu0 %v162
  %188 = vmatprep.subr.bf16.mxu0 0
  %189 = vmatpush1.bf16.msra.mxu0 %v161
  %190 = vmatprep.subr.bf16.mxu0 0
  %191 = vmatpush1.bf16.msra.mxu0 %v160
  %192 = vmatprep.subr.bf16.mxu0 0
  %193 = vmatpush2.bf16.msra.mxu0 0
  %194 = vmatprep.subr.bf16.mxu0 0
  %195 = vmatpush2.bf16.msra.mxu0 0
  %196 = vmatprep.subr.bf16.mxu0 0
  %197 = vmatpush2.bf16.msra.mxu0 0
  %198 = vmatprep.subr.bf16.mxu0 0
  %199 = vmatpush2.bf16.msra.mxu0 0
  %200 = vmatprep.subr.bf16.mxu0 0
  %201 = vmatpush2.bf16.msra.mxu0 0
  %202 = vmatprep.subr.bf16.mxu0 0
  %203 = vmatpush2.bf16.msra.mxu0 0
  %204 = vmatprep.subr.bf16.mxu0 0
  %205 = vmatpush2.bf16.msra.mxu0 0
  %206 = vmatprep.subr.bf16.mxu0 0
  %207 = vmatpush2.bf16.msra.mxu0 0
  %208 = vmatprep.mubr.bf16.mxu0 0
  %209 = vmatmul.mubr.bf16.gmra.mxu0 %v112
  %v210 = vpop.f32.mrf.mxu0
  %v211 = vadd.f32 0.0, %v210
  %v212 = vpop.f32.mrf.mxu0
  %v213 = vpop.f32.mrf.mxu0
  %v214 = vadd.f32 0.0, %v213
  %v215 = vpop.f32.mrf.mxu0
  %216 = vmatprep.mubr.bf16.mxu0 0
  %217 = vmatmul.mubr.bf16.gmra.mxu0 %v113
  %v218 = vpop.f32.mrf.mxu0
  %v219 = vadd.f32 0.0, %v218
  %v220 = vpop.f32.mrf.mxu0
  %v221 = vpop.f32.mrf.mxu0
  %v222 = vadd.f32 0.0, %v221
  %v223 = vpop.f32.mrf.mxu0
  %224 = vmatprep.mubr.bf16.mxu0 0
  %225 = vmatmul.mubr.bf16.gmra.mxu0 %v114
  %v226 = vpop.f32.mrf.mxu0
  %v227 = vadd.f32 0.0, %v226
  %v228 = vpop.f32.mrf.mxu0
  %v229 = vpop.f32.mrf.mxu0
  %v230 = vadd.f32 0.0, %v229
  %v231 = vpop.f32.mrf.mxu0
  %232 = vmatprep.mubr.bf16.mxu0 0
  %233 = vmatmul.mubr.bf16.gmra.mxu0 %v115
  %v234 = vpop.f32.mrf.mxu0
  %v235 = vadd.f32 0.0, %v234
  %v236 = vpop.f32.mrf.mxu0
  %v237 = vpop.f32.mrf.mxu0
  %v238 = vadd.f32 0.0, %v237
  %v239 = vpop.f32.mrf.mxu0
  %240 = vmatprep.mubr.bf16.mxu0 0
  %241 = vmatmul.mubr.bf16.gmra.mxu0 %v116
  %v242 = vpop.f32.mrf.mxu0
  %v243 = vadd.f32 0.0, %v242
  %v244 = vpop.f32.mrf.mxu0
  %v245 = vpop.f32.mrf.mxu0
  %v246 = vadd.f32 0.0, %v245
  %v247 = vpop.f32.mrf.mxu0
  %248 = vmatprep.mubr.bf16.mxu0 0
  %249 = vmatmul.mubr.bf16.gmra.mxu0 %v117
  %v250 = vpop.f32.mrf.mxu0
  %v251 = vadd.f32 0.0, %v250
  %v252 = vpop.f32.mrf.mxu0
  %v253 = vpop.f32.mrf.mxu0
  %v254 = vadd.f32 0.0, %v253
  %v255 = vpop.f32.mrf.mxu0
  %256 = vmatprep.mubr.bf16.mxu0 0
  %257 = vmatmul.mubr.bf16.gmra.mxu0 %v118
  %v258 = vpop.f32.mrf.mxu0
  %v259 = vadd.f32 0.0, %v258
  %v260 = vpop.f32.mrf.mxu0
  %v261 = vpop.f32.mrf.mxu0
  %v262 = vadd.f32 0.0, %v261
  %v263 = vpop.f32.mrf.mxu0
  %264 = vmatprep.mubr.bf16.mxu0 0
  %265 = vmatmul.mubr.bf16.gmra.mxu0 %v119
  %v266 = vpop.f32.mrf.mxu0
  %v267 = vadd.f32 0.0, %v266
  %v268 = vpop.f32.mrf.mxu0
  %v269 = vpop.f32.mrf.mxu0
  %v270 = vadd.f32 0.0, %v269
  %v271 = vpop.f32.mrf.mxu0
  %272 = vdwg.mxu0
  %v273 = vadd.f32 %v32, %v211
  %v274 = vadd.f32 %v33, %v214
  %v275 = vadd.f32 %v34, %v219
  %v276 = vadd.f32 %v35, %v222
  %v277 = vadd.f32 %v36, %v227
  %v278 = vadd.f32 %v37, %v230
  %v279 = vadd.f32 %v38, %v235
  %v280 = vadd.f32 %v39, %v238
  %v281 = vadd.f32 %v40, %v243
  %v282 = vadd.f32 %v41, %v246
  %v283 = vadd.f32 %v42, %v251
  %v284 = vadd.f32 %v43, %v254
  %v285 = vadd.f32 %v44, %v259
  %v286 = vadd.f32 %v45, %v262
  %v287 = vadd.f32 %v46, %v267
  %v288 = vadd.f32 %v47, %v270
  %289 = vst [vmem:[#allocation2] sm:$0xff] %v273
  %290 = vst [vmem:[#allocation2 + $0x8] sm:$0xff] %v274
  %291 = vst [vmem:[#allocation2 + $0x10] sm:$0xff] %v275
  %292 = vst [vmem:[#allocation2 + $0x18] sm:$0xff] %v276
  %293 = vst [vmem:[#allocation2 + $0x20] sm:$0xff] %v277
  %294 = vst [vmem:[#allocation2 + $0x28] sm:$0xff] %v278
  %295 = vst [vmem:[#allocation2 + $0x30] sm:$0xff] %v279
  %296 = vst [vmem:[#allocation2 + $0x38] sm:$0xff] %v280
  %297 = vst [vmem:[#allocation2 + $0x40] sm:$0xff] %v281
  %298 = vst [vmem:[#allocation2 + $0x48] sm:$0xff] %v282
  %299 = vst [vmem:[#allocation2 + $0x50] sm:$0xff] %v283
  %300 = vst [vmem:[#allocation2 + $0x58] sm:$0xff] %v284
  %301 = vst [vmem:[#allocation2 + $0x60] sm:$0xff] %v285
  %302 = vst [vmem:[#allocation2 + $0x68] sm:$0xff] %v286
  %303 = vst [vmem:[#allocation2 + $0x70] sm:$0xff] %v287
  %304 = vst [vmem:[#allocation2 + $0x78] sm:$0xff] %v288
  // Predicated region
  $region14: #{_lambda_.4} parent=0 // pred_check
    %p305 = pneg %p12
  $region15: #{_lambda_.4} parent=0 // pred_check_branch
    %307 = sbr.rel (%p305) target = $region17
  $region16: #{_lambda_.4} parent=0 // pred_region
    %v308 = vld [vmem:[#allocation2] sm:$0xff]
    %v309 = vld [vmem:[#allocation2 + $0x8] sm:$0xff]
    %v310 = vld [vmem:[#allocation2 + $0x10] sm:$0xff]
    %v311 = vld [vmem:[#allocation2 + $0x18] sm:$0xff]
    %v312 = vld [vmem:[#allocation2 + $0x20] sm:$0xff]
    %v313 = vld [vmem:[#allocation2 + $0x28] sm:$0xff]
    %v314 = vld [vmem:[#allocation2 + $0x30] sm:$0xff]
    %v315 = vld [vmem:[#allocation2 + $0x38] sm:$0xff]
    %v316 = vld [vmem:[#allocation2 + $0x40] sm:$0xff]
    %v317 = vld [vmem:[#allocation2 + $0x48] sm:$0xff]
    %v318 = vld [vmem:[#allocation2 + $0x50] sm:$0xff]
    %v319 = vld [vmem:[#allocation2 + $0x58] sm:$0xff]
    %v320 = vld [vmem:[#allocation2 + $0x60] sm:$0xff]
    %v321 = vld [vmem:[#allocation2 + $0x68] sm:$0xff]
    %v322 = vld [vmem:[#allocation2 + $0x70] sm:$0xff]
    %v323 = vld [vmem:[#allocation2 + $0x78] sm:$0xff]
    %vm324 = vcmp.ge.f32.partialorder %v308, 0.0
    %vm325 = vcmp.ge.f32.partialorder %v309, 0.0
    %vm326 = vcmp.ge.f32.partialorder %v310, 0.0
    %vm327 = vcmp.ge.f32.partialorder %v311, 0.0
    %vm328 = vcmp.ge.f32.partialorder %v312, 0.0
    %vm329 = vcmp.ge.f32.partialorder %v313, 0.0
    %vm330 = vcmp.ge.f32.partialorder %v314, 0.0
    %vm331 = vcmp.ge.f32.partialorder %v315, 0.0
    %vm332 = vcmp.ge.f32.partialorder %v316, 0.0
    %vm333 = vcmp.ge.f32.partialorder %v317, 0.0
    %vm334 = vcmp.ge.f32.partialorder %v318, 0.0
    %vm335 = vcmp.ge.f32.partialorder %v319, 0.0
    %vm336 = vcmp.ge.f32.partialorder %v320, 0.0
    %vm337 = vcmp.ge.f32.partialorder %v321, 0.0
    %vm338 = vcmp.ge.f32.partialorder %v322, 0.0
    %vm339 = vcmp.ge.f32.partialorder %v323, 0.0
    %v340 = vmul.f32 %v308, 0.2
    %v341 = vmul.f32 %v309, 0.2
    %v342 = vmul.f32 %v310, 0.2
    %v343 = vmul.f32 %v311, 0.2
    %v344 = vmul.f32 %v312, 0.2
    %v345 = vmul.f32 %v313, 0.2
    %v346 = vmul.f32 %v314, 0.2
    %v347 = vmul.f32 %v315, 0.2
    %v348 = vmul.f32 %v316, 0.2
    %v349 = vmul.f32 %v317, 0.2
    %v350 = vmul.f32 %v318, 0.2
    %v351 = vmul.f32 %v319, 0.2
    %v352 = vmul.f32 %v320, 0.2
    %v353 = vmul.f32 %v321, 0.2
    %v354 = vmul.f32 %v322, 0.2
    %v355 = vmul.f32 %v323, 0.2
    %v356 = vsel %vm324, %v308, %v340
    %v357 = vsel %vm325, %v309, %v341
    %v358 = vsel %vm326, %v310, %v342
    %v359 = vsel %vm327, %v311, %v343
    %v360 = vsel %vm328, %v312, %v344
    %v361 = vsel %vm329, %v313, %v345
    %v362 = vsel %vm330, %v314, %v346
    %v363 = vsel %vm331, %v315, %v347
    %v364 = vsel %vm332, %v316, %v348
    %v365 = vsel %vm333, %v317, %v349
    %v366 = vsel %vm334, %v318, %v350
    %v367 = vsel %vm335, %v319, %v351
    %v368 = vsel %vm336, %v320, %v352
    %v369 = vsel %vm337, %v321, %v353
    %v370 = vsel %vm338, %v322, %v354
    %v371 = vsel %vm339, %v323, %v355
    %v372 = vpack.c.bf16 %v357, %v356
    %v373 = vpack.c.bf16 %v359, %v358
    %v374 = vpack.c.bf16 %v361, %v360
    %v375 = vpack.c.bf16 %v363, %v362
    %v376 = vpack.c.bf16 %v365, %v364
    %v377 = vpack.c.bf16 %v367, %v366
    %v378 = vpack.c.bf16 %v369, %v368
    %v379 = vpack.c.bf16 %v371, %v370
    %v388 = vunpack.c.l.b16 %v372
    %v389 = vunpack.c.h.b16 %v372
    %v390 = vunpack.c.l.b16 %v373
    %v391 = vunpack.c.h.b16 %v373
    %v392 = vunpack.c.l.b16 %v374
    %v393 = vunpack.c.h.b16 %v374
    %v394 = vunpack.c.l.b16 %v375
    %v395 = vunpack.c.h.b16 %v375
    %v396 = vunpack.c.l.b16 %v376
    %v397 = vunpack.c.h.b16 %v376
    %v398 = vunpack.c.l.b16 %v377
    %v399 = vunpack.c.h.b16 %v377
    %v400 = vunpack.c.l.b16 %v378
    %v401 = vunpack.c.h.b16 %v378
    %v402 = vunpack.c.l.b16 %v379
    %v403 = vunpack.c.h.b16 %v379
    %v404 = vpack.c.b16 %v388, %v388
    %v405 = vpack.c.b16 %v389, %v389
    %v406 = vpack.c.b16 %v390, %v390
    %v407 = vpack.c.b16 %v391, %v391
    %v408 = vpack.c.b16 %v392, %v392
    %v409 = vpack.c.b16 %v393, %v393
    %v410 = vpack.c.b16 %v394, %v394
    %v411 = vpack.c.b16 %v395, %v395
    %v412 = vpack.c.b16 %v396, %v396
    %v413 = vpack.c.b16 %v397, %v397
    %v414 = vpack.c.b16 %v398, %v398
    %v415 = vpack.c.b16 %v399, %v399
    %v416 = vpack.c.b16 %v400, %v400
    %v417 = vpack.c.b16 %v401, %v401
    %v418 = vpack.c.b16 %v402, %v402
    %v419 = vpack.c.b16 %v403, %v403
    %436 = vst [vmem:[%s2] sm:$0xf] %v404
    %437 = vst [vmem:[%s2 + $0x4] sm:$0xf] %v405
    %438 = vst [vmem:[%s2 + $0x8] sm:$0xf] %v406
    %439 = vst [vmem:[%s2 + $0xc] sm:$0xf] %v407
    %440 = vst [vmem:[%s2 + $0x10] sm:$0xf] %v408
    %441 = vst [vmem:[%s2 + $0x14] sm:$0xf] %v409
    %442 = vst [vmem:[%s2 + $0x18] sm:$0xf] %v410
    %443 = vst [vmem:[%s2 + $0x1c] sm:$0xf] %v411
    %444 = vst [vmem:[%s2 + $0x20] sm:$0xf] %v412
    %445 = vst [vmem:[%s2 + $0x24] sm:$0xf] %v413
    %446 = vst [vmem:[%s2 + $0x28] sm:$0xf] %v414
    %447 = vst [vmem:[%s2 + $0x2c] sm:$0xf] %v415
    %448 = vst [vmem:[%s2 + $0x30] sm:$0xf] %v416
    %449 = vst [vmem:[%s2 + $0x34] sm:$0xf] %v417
    %450 = vst [vmem:[%s2 + $0x38] sm:$0xf] %v418
    %451 = vst [vmem:[%s2 + $0x3c] sm:$0xf] %v419
  $region17: #{_lambda_.4} parent=0 // pred_fallthru
    _
  // Predicated region
  $region18: #{_lambda_.4} parent=0 // pred_check
    _
  $region19: #{_lambda_.4} parent=0 // pred_check_branch
    %453 = sbr.rel (0) target = $region21
  $region20: #{_lambda_.4} parent=0 // pred_region
    _
  $region21: #{_lambda_.4} parent=0 // pred_fallthru
    _
  // Predicated region
  $region22: #{_lambda_.4} parent=0 // pred_check
    _
  $region23: #{_lambda_.4} parent=0 // pred_check_branch
    %455 = sbr.rel (0) target = $region25
  $region24: #{_lambda_.4} parent=0 // pred_region
    _
  $region25: #{_lambda_.4} parent=0 // pred_fallthru
    _

// kernel: _lambda_.6
$region0: #{_lambda_.6}
  #allocation0 [shape = 'u32[]', space=smem, size = 0x4, offset = 0x4, fixed_abs, tag = 'smem constant byte address 0x4 - core index']
  #allocation1 [shape = 'u32[144,128]{1,0:T(1,128)}', space=vmem, size = 0x12000, scoped, tag = 'internal scratch']
  #allocation2 [shape = 'f32[32,128]{1,0:T(8,128)}', space=vmem, size = 0x4000, scoped, tag = 'scratch operand']
  %s0 = inlined_call_operand.vmem [shape: bf16[32,128], index: 0, kind: input, shape index: {}]
  %s1 = inlined_call_operand.vmem [shape: bf16[128,128], index: 1, kind: input, shape index: {}]
  %s2 = inlined_call_operand.vmem [shape: bf16[32,128], index: 2, kind: output, shape index: {}]
  %s3 = sld [smem:[#allocation0]]
  $region26: #{_lambda_.6} parent=0
    _
  %s5 = ssub.s32 1, %s3
  %s6 = scalar_select 0, %s5, %s3
  // Predicated region
  $region2: #{_lambda_.6} parent=0 // pred_check
    _
  $region3: #{_lambda_.6} parent=0 // pred_check_branch
    %8 = sbr.rel (0) target = $region5
  $region4: #{_lambda_.6} parent=0 // pred_region
    _
  $region5: #{_lambda_.6} parent=0 // pred_fallthru
    _
  // Predicated region
  $region6: #{_lambda_.6} parent=0 // pred_check
    _
  $region7: #{_lambda_.6} parent=0 // pred_check_branch
    %10 = sbr.rel (0) target = $region9
  $region8: #{_lambda_.6} parent=0 // pred_region
    _
  $region9: #{_lambda_.6} parent=0 // pred_fallthru
    _
  %p12 = scmp.eq.s32.totalorder 0, 0
  // Predicated region
  $region10: #{_lambda_.6} parent=0 // pred_check
    %p13 = pneg %p12
  $region11: #{_lambda_.6} parent=0 // pred_check_branch
    %15 = sbr.rel (%p13) target = $region13
  $region12: #{_lambda_.6} parent=0 // pred_region
    %16 = vst [vmem:[#allocation2] sm:$0xff] 0.0
    %17 = vst [vmem:[#allocation2 + $0x8] sm:$0xff] 0.0
    %18 = vst [vmem:[#allocation2 + $0x10] sm:$0xff] 0.0
    %19 = vst [vmem:[#allocation2 + $0x18] sm:$0xff] 0.0
  $region13: #{_lambda_.6} parent=0 // pred_fallthru
    _
  %v20 = vld [vmem:[#allocation2] sm:$0xff]
  %v21 = vld [vmem:[#allocation2 + $0x8] sm:$0xff]
  %v22 = vld [vmem:[#allocation2 + $0x10] sm:$0xff]
  %v23 = vld [vmem:[#allocation2 + $0x18] sm:$0xff]
  %v24 = vld [vmem:[%s0] sm:$0xf]
  %v25 = vld [vmem:[%s0 + $0x4] sm:$0xf]
  %v26 = vld [vmem:[%s0 + $0x8] sm:$0xf]
  %v27 = vld [vmem:[%s0 + $0xc] sm:$0xf]
  %v28 = vld [vmem:[%s1] sm:$0xf]
  %v29 = vld [vmem:[%s1 + $0x4] sm:$0xf]
  %v30 = vld [vmem:[%s1 + $0x8] sm:$0xf]
  %v31 = vld [vmem:[%s1 + $0xc] sm:$0xf]
  %v32 = vld [vmem:[%s1 + $0x10] sm:$0xf]
  %v33 = vld [vmem:[%s1 + $0x14] sm:$0xf]
  %v34 = vld [vmem:[%s1 + $0x18] sm:$0xf]
  %v35 = vld [vmem:[%s1 + $0x1c] sm:$0xf]
  %v36 = vld [vmem:[%s1 + $0x20] sm:$0xf]
  %v37 = vld [vmem:[%s1 + $0x24] sm:$0xf]
  %v38 = vld [vmem:[%s1 + $0x28] sm:$0xf]
  %v39 = vld [vmem:[%s1 + $0x2c] sm:$0xf]
  %v40 = vld [vmem:[%s1 + $0x30] sm:$0xf]
  %v41 = vld [vmem:[%s1 + $0x34] sm:$0xf]
  %v42 = vld [vmem:[%s1 + $0x38] sm:$0xf]
  %v43 = vld [vmem:[%s1 + $0x3c] sm:$0xf]
  %v48 = vunpack.c.l.b16 %v24
  %v49 = vunpack.c.l.b16 %v25
  %v50 = vunpack.c.l.b16 %v26
  %v51 = vunpack.c.l.b16 %v27
  %v52 = vpack.c.b16 %v49, %v48
  %v53 = vpack.c.b16 %v51, %v50
  %v72 = vunpack.c.l.b16 %v28
  %v73 = vunpack.c.l.b16 %v29
  %v74 = vunpack.c.l.b16 %v30
  %v75 = vunpack.c.l.b16 %v31
  %v76 = vunpack.c.l.b16 %v32
  %v77 = vunpack.c.l.b16 %v33
  %v78 = vunpack.c.l.b16 %v34
  %v79 = vunpack.c.l.b16 %v35
  %v80 = vunpack.c.l.b16 %v36
  %v81 = vunpack.c.l.b16 %v37
  %v82 = vunpack.c.l.b16 %v38
  %v83 = vunpack.c.l.b16 %v39
  %v84 = vunpack.c.l.b16 %v40
  %v85 = vunpack.c.l.b16 %v41
  %v86 = vunpack.c.l.b16 %v42
  %v87 = vunpack.c.l.b16 %v43
  %v88 = vpack.c.b16 %v73, %v72
  %v89 = vpack.c.b16 %v75, %v74
  %v90 = vpack.c.b16 %v77, %v76
  %v91 = vpack.c.b16 %v79, %v78
  %v92 = vpack.c.b16 %v81, %v80
  %v93 = vpack.c.b16 %v83, %v82
  %v94 = vpack.c.b16 %v85, %v84
  %v95 = vpack.c.b16 %v87, %v86
  %104 = vmatprep.subr.bf16.mxu0 0
  %105 = vmatpush1.bf16.msra.mxu0 %v95
  %106 = vmatprep.subr.bf16.mxu0 0
  %107 = vmatpush1.bf16.msra.mxu0 %v94
  %108 = vmatprep.subr.bf16.mxu0 0
  %109 = vmatpush1.bf16.msra.mxu0 %v93
  %110 = vmatprep.subr.bf16.mxu0 0
  %111 = vmatpush1.bf16.msra.mxu0 %v92
  %112 = vmatprep.subr.bf16.mxu0 0
  %113 = vmatpush1.bf16.msra.mxu0 %v91
  %114 = vmatprep.subr.bf16.mxu0 0
  %115 = vmatpush1.bf16.msra.mxu0 %v90
  %116 = vmatprep.subr.bf16.mxu0 0
  %117 = vmatpush1.bf16.msra.mxu0 %v89
  %118 = vmatprep.subr.bf16.mxu0 0
  %119 = vmatpush1.bf16.msra.mxu0 %v88
  %120 = vmatprep.subr.bf16.mxu0 0
  %121 = vmatpush2.bf16.msra.mxu0 0
  %122 = vmatprep.subr.bf16.mxu0 0
  %123 = vmatpush2.bf16.msra.mxu0 0
  %124 = vmatprep.subr.bf16.mxu0 0
  %125 = vmatpush2.bf16.msra.mxu0 0
  %126 = vmatprep.subr.bf16.mxu0 0
  %127 = vmatpush2.bf16.msra.mxu0 0
  %128 = vmatprep.subr.bf16.mxu0 0
  %129 = vmatpush2.bf16.msra.mxu0 0
  %130 = vmatprep.subr.bf16.mxu0 0
  %131 = vmatpush2.bf16.msra.mxu0 0
  %132 = vmatprep.subr.bf16.mxu0 0
  %133 = vmatpush2.bf16.msra.mxu0 0
  %134 = vmatprep.subr.bf16.mxu0 0
  %135 = vmatpush2.bf16.msra.mxu0 0
  %136 = vmatprep.mubr.bf16.mxu0 0
  %137 = vmatmul.mubr.bf16.gmra.mxu0 %v52
  %v138 = vpop.f32.mrf.mxu0
  %v139 = vadd.f32 0.0, %v138
  %v140 = vpop.f32.mrf.mxu0
  %v141 = vpop.f32.mrf.mxu0
  %v142 = vadd.f32 0.0, %v141
  %v143 = vpop.f32.mrf.mxu0
  %144 = vmatprep.mubr.bf16.mxu0 0
  %145 = vmatmul.mubr.bf16.gmra.mxu0 %v53
  %v146 = vpop.f32.mrf.mxu0
  %v147 = vadd.f32 0.0, %v146
  %v148 = vpop.f32.mrf.mxu0
  %v149 = vpop.f32.mrf.mxu0
  %v150 = vadd.f32 0.0, %v149
  %v151 = vpop.f32.mrf.mxu0
  %152 = vdwg.mxu0
  %v153 = vadd.f32 %v20, %v139
  %v154 = vadd.f32 %v21, %v142
  %v155 = vadd.f32 %v22, %v147
  %v156 = vadd.f32 %v23, %v150
  %157 = vst [vmem:[#allocation2] sm:$0xff] %v153
  %158 = vst [vmem:[#allocation2 + $0x8] sm:$0xff] %v154
  %159 = vst [vmem:[#allocation2 + $0x10] sm:$0xff] %v155
  %160 = vst [vmem:[#allocation2 + $0x18] sm:$0xff] %v156
  // Predicated region
  $region14: #{_lambda_.6} parent=0 // pred_check
    %p161 = pneg %p12
  $region15: #{_lambda_.6} parent=0 // pred_check_branch
    %163 = sbr.rel (%p161) target = $region17
  $region16: #{_lambda_.6} parent=0 // pred_region
    %v164 = vld [vmem:[#allocation2] sm:$0xff]
    %v165 = vld [vmem:[#allocation2 + $0x8] sm:$0xff]
    %v166 = vld [vmem:[#allocation2 + $0x10] sm:$0xff]
    %v167 = vld [vmem:[#allocation2 + $0x18] sm:$0xff]
    %vm168 = vcmp.ge.f32.partialorder %v164, 0.0
    %vm169 = vcmp.ge.f32.partialorder %v165, 0.0
    %vm170 = vcmp.ge.f32.partialorder %v166, 0.0
    %vm171 = vcmp.ge.f32.partialorder %v167, 0.0
    %v172 = vmul.f32 %v164, 0.2
    %v173 = vmul.f32 %v165, 0.2
    %v174 = vmul.f32 %v166, 0.2
    %v175 = vmul.f32 %v167, 0.2
    %v176 = vsel %vm168, %v164, %v172
    %v177 = vsel %vm169, %v165, %v173
    %v178 = vsel %vm170, %v166, %v174
    %v179 = vsel %vm171, %v167, %v175
    %v180 = vpack.c.bf16 %v177, %v176
    %v181 = vpack.c.bf16 %v179, %v178
    %v184 = vunpack.c.l.b16 %v180
    %v185 = vunpack.c.h.b16 %v180
    %v186 = vunpack.c.l.b16 %v181
    %v187 = vunpack.c.h.b16 %v181
    %v188 = vpack.c.b16 %v184, %v184
    %v189 = vpack.c.b16 %v185, %v185
    %v190 = vpack.c.b16 %v186, %v186
    %v191 = vpack.c.b16 %v187, %v187
    %196 = vst [vmem:[%s2] sm:$0xf] %v188
    %197 = vst [vmem:[%s2 + $0x4] sm:$0xf] %v189
    %198 = vst [vmem:[%s2 + $0x8] sm:$0xf] %v190
    %199 = vst [vmem:[%s2 + $0xc] sm:$0xf] %v191
  $region17: #{_lambda_.6} parent=0 // pred_fallthru
    _
  // Predicated region
  $region18: #{_lambda_.6} parent=0 // pred_check
    _
  $region19: #{_lambda_.6} parent=0 // pred_check_branch
    %201 = sbr.rel (0) target = $region21
  $region20: #{_lambda_.6} parent=0 // pred_region
    _
  $region21: #{_lambda_.6} parent=0 // pred_fallthru
    _
  // Predicated region
  $region22: #{_lambda_.6} parent=0 // pred_check
    _
  $region23: #{_lambda_.6} parent=0 // pred_check_branch
    %203 = sbr.rel (0) target = $region25
  $region24: #{_lambda_.6} parent=0 // pred_region
    _
  $region25: #{_lambda_.6} parent=0 // pred_fallthru
    _

// kernel: _lambda_.7
$region0: #{_lambda_.7}
  #allocation0 [shape = 'u32[]', space=smem, size = 0x4, offset = 0x4, fixed_abs, tag = 'smem constant byte address 0x4 - core index']
  #allocation1 [shape = 'u32[144,128]{1,0:T(1,128)}', space=vmem, size = 0x12000, scoped, tag = 'internal scratch']
  #allocation2 [shape = 'f32[8,128]{1,0:T(8,128)}', space=vmem, size = 0x1000, scoped, tag = 'scratch operand']
  %s0 = inlined_call_operand.vmem [shape: bf16[8,256], index: 0, kind: input, shape index: {}]
  %s1 = inlined_call_operand.vmem [shape: bf16[256,128], index: 1, kind: input, shape index: {}]
  %s2 = inlined_call_operand.vmem [shape: f32[8,128], index: 2, kind: output, shape index: {}]
  %s3 = sld [smem:[#allocation0]]
  $region26: #{_lambda_.7} parent=0
    _
  %s5 = ssub.s32 1, %s3
  %s6 = scalar_select 0, %s5, %s3
  // Predicated region
  $region2: #{_lambda_.7} parent=0 // pred_check
    _
  $region3: #{_lambda_.7} parent=0 // pred_check_branch
    %8 = sbr.rel (0) target = $region5
  $region4: #{_lambda_.7} parent=0 // pred_region
    _
  $region5: #{_lambda_.7} parent=0 // pred_fallthru
    _
  // Predicated region
  $region6: #{_lambda_.7} parent=0 // pred_check
    _
  $region7: #{_lambda_.7} parent=0 // pred_check_branch
    %10 = sbr.rel (0) target = $region9
  $region8: #{_lambda_.7} parent=0 // pred_region
    _
  $region9: #{_lambda_.7} parent=0 // pred_fallthru
    _
  %p12 = scmp.eq.s32.totalorder 0, 0
  // Predicated region
  $region10: #{_lambda_.7} parent=0 // pred_check
    %p13 = pneg %p12
  $region11: #{_lambda_.7} parent=0 // pred_check_branch
    %15 = sbr.rel (%p13) target = $region13
  $region12: #{_lambda_.7} parent=0 // pred_region
    %16 = vst [vmem:[#allocation2] sm:$0xff] 0.0
  $region13: #{_lambda_.7} parent=0 // pred_fallthru
    _
  %v17 = vld [vmem:[#allocation2] sm:$0xff]
  %v18 = vld [vmem:[%s0] sm:$0xff]
  %v19 = vld [vmem:[%s1] sm:$0xf]
  %v20 = vld [vmem:[%s1 + $0x4] sm:$0xf]
  %v21 = vld [vmem:[%s1 + $0x8] sm:$0xf]
  %v22 = vld [vmem:[%s1 + $0xc] sm:$0xf]
  %v23 = vld [vmem:[%s1 + $0x10] sm:$0xf]
  %v24 = vld [vmem:[%s1 + $0x14] sm:$0xf]
  %v25 = vld [vmem:[%s1 + $0x18] sm:$0xf]
  %v26 = vld [vmem:[%s1 + $0x1c] sm:$0xf]
  %v27 = vld [vmem:[%s1 + $0x20] sm:$0xf]
  %v28 = vld [vmem:[%s1 + $0x24] sm:$0xf]
  %v29 = vld [vmem:[%s1 + $0x28] sm:$0xf]
  %v30 = vld [vmem:[%s1 + $0x2c] sm:$0xf]
  %v31 = vld [vmem:[%s1 + $0x30] sm:$0xf]
  %v32 = vld [vmem:[%s1 + $0x34] sm:$0xf]
  %v33 = vld [vmem:[%s1 + $0x38] sm:$0xf]
  %v34 = vld [vmem:[%s1 + $0x3c] sm:$0xf]
  %v35 = vld [vmem:[%s1 + $0x40] sm:$0xf]
  %v36 = vld [vmem:[%s1 + $0x44] sm:$0xf]
  %v37 = vld [vmem:[%s1 + $0x48] sm:$0xf]
  %v38 = vld [vmem:[%s1 + $0x4c] sm:$0xf]
  %v39 = vld [vmem:[%s1 + $0x50] sm:$0xf]
  %v40 = vld [vmem:[%s1 + $0x54] sm:$0xf]
  %v41 = vld [vmem:[%s1 + $0x58] sm:$0xf]
  %v42 = vld [vmem:[%s1 + $0x5c] sm:$0xf]
  %v43 = vld [vmem:[%s1 + $0x60] sm:$0xf]
  %v44 = vld [vmem:[%s1 + $0x64] sm:$0xf]
  %v45 = vld [vmem:[%s1 + $0x68] sm:$0xf]
  %v46 = vld [vmem:[%s1 + $0x6c] sm:$0xf]
  %v47 = vld [vmem:[%s1 + $0x70] sm:$0xf]
  %v48 = vld [vmem:[%s1 + $0x74] sm:$0xf]
  %v49 = vld [vmem:[%s1 + $0x78] sm:$0xf]
  %v50 = vld [vmem:[%s1 + $0x7c] sm:$0xf]
  %v52 = vunpack.c.l.b16 %v18
  %v53 = vunpack.c.h.b16 %v18
  %v54 = vpack.c.b16 %v52, %v52
  %v55 = vpack.c.b16 %v53, %v53
  %v90 = vunpack.c.l.b16 %v19
  %v91 = vunpack.c.l.b16 %v20
  %v92 = vunpack.c.l.b16 %v21
  %v93 = vunpack.c.l.b16 %v22
  %v94 = vunpack.c.l.b16 %v23
  %v95 = vunpack.c.l.b16 %v24
  %v96 = vunpack.c.l.b16 %v25
  %v97 = vunpack.c.l.b16 %v26
  %v98 = vunpack.c.l.b16 %v27
  %v99 = vunpack.c.l.b16 %v28
  %v100 = vunpack.c.l.b16 %v29
  %v101 = vunpack.c.l.b16 %v30
  %v102 = vunpack.c.l.b16 %v31
  %v103 = vunpack.c.l.b16 %v32
  %v104 = vunpack.c.l.b16 %v33
  %v105 = vunpack.c.l.b16 %v34
  %v106 = vunpack.c.l.b16 %v35
  %v107 = vunpack.c.l.b16 %v36
  %v108 = vunpack.c.l.b16 %v37
  %v109 = vunpack.c.l.b16 %v38
  %v110 = vunpack.c.l.b16 %v39
  %v111 = vunpack.c.l.b16 %v40
  %v112 = vunpack.c.l.b16 %v41
  %v113 = vunpack.c.l.b16 %v42
  %v114 = vunpack.c.l.b16 %v43
  %v115 = vunpack.c.l.b16 %v44
  %v116 = vunpack.c.l.b16 %v45
  %v117 = vunpack.c.l.b16 %v46
  %v118 = vunpack.c.l.b16 %v47
  %v119 = vunpack.c.l.b16 %v48
  %v120 = vunpack.c.l.b16 %v49
  %v121 = vunpack.c.l.b16 %v50
  %v122 = vpack.c.b16 %v91, %v90
  %v123 = vpack.c.b16 %v93, %v92
  %v124 = vpack.c.b16 %v95, %v94
  %v125 = vpack.c.b16 %v97, %v96
  %v126 = vpack.c.b16 %v99, %v98
  %v127 = vpack.c.b16 %v101, %v100
  %v128 = vpack.c.b16 %v103, %v102
  %v129 = vpack.c.b16 %v105, %v104
  %v130 = vpack.c.b16 %v107, %v106
  %v131 = vpack.c.b16 %v109, %v108
  %v132 = vpack.c.b16 %v111, %v110
  %v133 = vpack.c.b16 %v113, %v112
  %v134 = vpack.c.b16 %v115, %v114
  %v135 = vpack.c.b16 %v117, %v116
  %v136 = vpack.c.b16 %v119, %v118
  %v137 = vpack.c.b16 %v121, %v120
  %154 = vmatprep.subr.bf16.mxu0 0
  %155 = vmatpush1.bf16.msra.mxu0 %v129
  %156 = vmatprep.subr.bf16.mxu0 0
  %157 = vmatpush1.bf16.msra.mxu0 %v128
  %158 = vmatprep.subr.bf16.mxu0 0
  %159 = vmatpush1.bf16.msra.mxu0 %v127
  %160 = vmatprep.subr.bf16.mxu0 0
  %161 = vmatpush1.bf16.msra.mxu0 %v126
  %162 = vmatprep.subr.bf16.mxu0 0
  %163 = vmatpush1.bf16.msra.mxu0 %v125
  %164 = vmatprep.subr.bf16.mxu0 0
  %165 = vmatpush1.bf16.msra.mxu0 %v124
  %166 = vmatprep.subr.bf16.mxu0 0
  %167 = vmatpush1.bf16.msra.mxu0 %v123
  %168 = vmatprep.subr.bf16.mxu0 0
  %169 = vmatpush1.bf16.msra.mxu0 %v122
  %170 = vmatprep.subr.bf16.mxu0 0
  %171 = vmatpush2.bf16.msra.mxu0 %v137
  %172 = vmatprep.subr.bf16.mxu0 0
  %173 = vmatpush2.bf16.msra.mxu0 %v136
  %174 = vmatprep.subr.bf16.mxu0 0
  %175 = vmatpush2.bf16.msra.mxu0 %v135
  %176 = vmatprep.subr.bf16.mxu0 0
  %177 = vmatpush2.bf16.msra.mxu0 %v134
  %178 = vmatprep.subr.bf16.mxu0 0
  %179 = vmatpush2.bf16.msra.mxu0 %v133
  %180 = vmatprep.subr.bf16.mxu0 0
  %181 = vmatpush2.bf16.msra.mxu0 %v132
  %182 = vmatprep.subr.bf16.mxu0 0
  %183 = vmatpush2.bf16.msra.mxu0 %v131
  %184 = vmatprep.subr.bf16.mxu0 0
  %185 = vmatpush2.bf16.msra.mxu0 %v130
  %186 = vmatprep.mubr.bf16.mxu0 %v55
  %187 = vmatmul.mubr.bf16.gmra.mxu0 %v54
  %v188 = vpop.f32.mrf.mxu0
  %v189 = vadd.f32 0.0, %v188
  %v190 = vpop.f32.mrf.mxu0
  %v191 = vpop.f32.mrf.mxu0
  %v192 = vpop.f32.mrf.mxu0
  %193 = vdwg.mxu0
  %v194 = vadd.f32 %v17, %v189
  %195 = vst [vmem:[#allocation2] sm:$0xff] %v194
  // Predicated region
  $region14: #{_lambda_.7} parent=0 // pred_check
    %p196 = pneg %p12
  $region15: #{_lambda_.7} parent=0 // pred_check_branch
    %198 = sbr.rel (%p196) target = $region17
  $region16: #{_lambda_.7} parent=0 // pred_region
    %v199 = vld [vmem:[#allocation2] sm:$0xff]
    %200 = vst [vmem:[%s2] sm:$0xff] %v199
  $region17: #{_lambda_.7} parent=0 // pred_fallthru
    _
  // Predicated region
  $region18: #{_lambda_.7} parent=0 // pred_check
    _
  $region19: #{_lambda_.7} parent=0 // pred_check_branch
    %202 = sbr.rel (0) target = $region21
  $region20: #{_lambda_.7} parent=0 // pred_region
    _
  $region21: #{_lambda_.7} parent=0 // pred_fallthru
    _
  // Predicated region
  $region22: #{_lambda_.7} parent=0 // pred_check
    _
  $region23: #{_lambda_.7} parent=0 // pred_check_branch
    %204 = sbr.rel (0) target = $region25
  $region24: #{_lambda_.7} parent=0 // pred_region
    _
  $region25: #{_lambda_.7} parent=0 // pred_fallthru
    _

</llo_original>
